<compile_context>
chip_gen: v5e
topology: v5e:2x2
jax: 0.10.0
libtpu: 0.0.40
codegen_flags: <defaults>
</compile_context>

<pallas_src>
import jax
import jax.numpy as jnp
from jax.experimental import pallas as pl
from jax.experimental.pallas import tpu as pltpu


# ------------------------------------------------------------------ kernel ---
def autoencoder_kernel(x_ref,
                       we1_ref, we2_ref, we3_ref,   # encoder weights (in, out), bf16
                       wf_ref,                       # fused [classifier | dec0] (16, 128), bf16
                       wd2_ref, wd3_ref,             # decoder weights (in, out), bf16
                       dec_ref, vec_ref):
    x = x_ref[...]                                   # (tile, 784) bf16

    # ---- encoder: Linear(784,128)+sigmoid, Linear(128,64)+sigmoid, Linear(64,16)
    h = jnp.dot(x, we1_ref[...], preferred_element_type=jnp.float32)
    h = jax.nn.sigmoid(h)
    h = jnp.dot(h.astype(jnp.bfloat16), we2_ref[...],
                preferred_element_type=jnp.float32)
    h = jax.nn.sigmoid(h)
    z = jnp.dot(h.astype(jnp.bfloat16), we3_ref[...],
                preferred_element_type=jnp.float32)          # (tile, 16) f32

    # ---- fused classifier + first decoder matmul: one (tile,16)@(16,128) push.
    # columns [0:10]  -> class logits, [10:64] -> zero pad, [64:128] -> dec0 output.
    fused = jnp.dot(z.astype(jnp.bfloat16), wf_ref[...],
                    preferred_element_type=jnp.float32)      # (tile, 128) f32
    vec_ref[...] = fused                                     # lane-dense store; wrapper slices [:, :10]

    # ---- decoder tail: tanh, Linear(64,128)+tanh, Linear(128,784)+tanh
    d = jnp.tanh(fused[:, 64:128])                           # (tile, 64)
    d = jnp.dot(d.astype(jnp.bfloat16), wd2_ref[...],
                preferred_element_type=jnp.float32)
    d = jnp.tanh(d)
    d = jnp.dot(d.astype(jnp.bfloat16), wd3_ref[...],
                preferred_element_type=jnp.float32)
    dec_ref[...] = jnp.tanh(d)                                # (tile, 784) f32


# ------------------------------------------------------- one-time weight prep ---
def prepare_params(params, compute_dtype=jnp.bfloat16):
    """Transpose PyTorch-layout weights to (in, out), cast to bf16, fuse
    classifier + first decoder layer.  Call ONCE (hoisted out of the forward)."""
    we1 = params["enc0"].T.astype(compute_dtype)    # (784, 128)
    we2 = params["enc2"].T.astype(compute_dtype)    # (128, 64)
    we3 = params["enc4"].T.astype(compute_dtype)    # (64, 16)
    wc  = params["cls"].T.astype(compute_dtype)     # (16, 10)
    wd1 = params["dec0"].T.astype(compute_dtype)    # (16, 64)
    wd2 = params["dec2"].T.astype(compute_dtype)    # (64, 128)
    wd3 = params["dec4"].T.astype(compute_dtype)    # (128, 784)

    # Fused lane-padded (16, 128): [0:10]=classifier, [64:128]=decoder layer 0.
    wf = jnp.zeros((16, 128), compute_dtype)
    wf = wf.at[:, 0:10].set(wc)
    wf = wf.at[:, 64:128].set(wd1)
    return {"we1": we1, "we2": we2, "we3": we3, "wf": wf, "wd2": wd2, "wd3": wd3}


# ----------------------------------------------------------------- wrapper ---
def autoencoder_supervise(x, prepared, *, batch_tile=256):
    """x: (B, 784) f32.  prepared: output of prepare_params (bf16, (in,out))."""
    B, D = x.shape
    assert D == 28 * 28

    # Batch tile: as large as possible (default 256), multiple of 16 for bf16
    # sublane packing; pad B up to a multiple of the tile if needed.
    tile = max(16, min(batch_tile, B))
    tile = (tile // 16) * 16
    n_blocks = -(-B // tile)
    Bp = n_blocks * tile
    if Bp != B:
        x = jnp.pad(x, ((0, Bp - B), (0, 0)))
    x = x.astype(jnp.bfloat16)                      # halve HBM traffic on the input

    full = lambda shape: pl.BlockSpec(shape, lambda i: (0, 0))

    we1, we2, we3 = prepared["we1"], prepared["we2"], prepared["we3"]
    wf, wd2, wd3 = prepared["wf"], prepared["wd2"], prepared["wd3"]

    dec, vec_pad = pl.pallas_call(
        autoencoder_kernel,
        out_shape=(
            jax.ShapeDtypeStruct((Bp, 784), jnp.float32),
            jax.ShapeDtypeStruct((Bp, 128), jnp.float32),   # lane-padded logits
        ),
        grid_spec=pltpu.PrefetchScalarGridSpec(
            num_scalar_prefetch=0,
            grid=(Bp // tile,),
            in_specs=[
                pl.BlockSpec((tile, 784), lambda i: (i, 0)),   # x tile
                full(we1.shape), full(we2.shape), full(we3.shape),
                full(wf.shape),
                full(wd2.shape), full(wd3.shape),
            ],
            out_specs=[
                pl.BlockSpec((tile, 784), lambda i: (i, 0)),
                pl.BlockSpec((tile, 128), lambda i: (i, 0)),
            ],
        ),
        compiler_params=pltpu.CompilerParams(
            dimension_semantics=("parallel",),
        ),
    )(x, we1, we2, we3, wf, wd2, wd3)

    return dec[:B], vec_pad[:B, :10]


# ----------------------------------------------------------------- helpers ---
def init_params(key):
    """Deterministic weights, PyTorch nn.Linear layout (out_features, in_features)."""
    shapes = {
        "enc0": (128, 784),
        "enc2": (64, 128),
        "enc4": (16, 64),
        "cls":  (10, 16),
        "dec0": (64, 16),
        "dec2": (128, 64),
        "dec4": (784, 128),
    }
    params = {}
    keys = jax.random.split(key, len(shapes))
    for k, (name, shp) in zip(keys, shapes.items()):
        fan_in = shp[1]
        bound = 1.0 / jnp.sqrt(fan_in)  # mimic nn.Linear default init range
        params[name] = jax.random.uniform(k, shp, jnp.float32, -bound, bound)
    return params


def reference_forward(x, p):
    h = jax.nn.sigmoid(x @ p["enc0"].T)
    h = jax.nn.sigmoid(h @ p["enc2"].T)
    z = h @ p["enc4"].T
    vec = z @ p["cls"].T
    d = jnp.tanh(z @ p["dec0"].T)
    d = jnp.tanh(d @ p["dec2"].T)
    d = jnp.tanh(d @ p["dec4"].T)
    return d, vec


# -------------------------------------------------------------------- main ---
if __name__ == "__main__":
    key = jax.random.PRNGKey(0)
    kx, kp = jax.random.split(key)

    B = 16
    x = jax.random.normal(kx, (B, 28 * 28), jnp.float32)
    params = init_params(kp)

    prepared = prepare_params(params)          # transposes + bf16 cast hoisted here
    dec, vec = autoencoder_supervise(x, prepared)
    jax.block_until_ready((dec, vec))

    dec_ref, vec_ref = reference_forward(x, params)
    assert dec.shape == (B, 784) and vec.shape == (B, 10)
    # bf16 matmul inputs with f32 accumulation -> loosened tolerance vs f32 ref.
    assert jnp.allclose(dec, dec_ref, atol=2e-2, rtol=2e-2)
    assert jnp.allclose(vec, vec_ref, atol=2e-2, rtol=2e-2)

    print("KERNEL_OK")
</pallas_src>

<mosaic_0001>
module attributes {stable_mosaic.version = 11 : i64} {
  func.func @autoencoder_kernel(%arg0: i32, %arg1: memref<16x784xbf16, #tpu.memory_space<vmem>>, %arg2: memref<784x128xbf16, #tpu.memory_space<vmem>>, %arg3: memref<128x64xbf16, #tpu.memory_space<vmem>>, %arg4: memref<64x16xbf16, #tpu.memory_space<vmem>>, %arg5: memref<16x128xbf16, #tpu.memory_space<vmem>>, %arg6: memref<64x128xbf16, #tpu.memory_space<vmem>>, %arg7: memref<128x784xbf16, #tpu.memory_space<vmem>>, %arg8: memref<16x784xf32, #tpu.memory_space<vmem>>, %arg9: memref<16x128xf32, #tpu.memory_space<vmem>>) attributes {dimension_semantics = [#tpu.dimension_semantics<parallel>], iteration_bounds = array<i64: 1>, scalar_prefetch = 0 : i64, scratch_operands = 0 : i64, tpu.core_type = #tpu.core_type<tc>, window_params = [{transform_indices = @transform_0, window_bounds = array<i64: 16, 784>}, {pipeline_mode = #tpu.pipeline_mode<synchronous>, transform_indices = @transform_1, window_bounds = array<i64: 784, 128>}, {pipeline_mode = #tpu.pipeline_mode<synchronous>, transform_indices = @transform_2, window_bounds = array<i64: 128, 64>}, {pipeline_mode = #tpu.pipeline_mode<synchronous>, transform_indices = @transform_3, window_bounds = array<i64: 64, 16>}, {pipeline_mode = #tpu.pipeline_mode<synchronous>, transform_indices = @transform_4, window_bounds = array<i64: 16, 128>}, {pipeline_mode = #tpu.pipeline_mode<synchronous>, transform_indices = @transform_5, window_bounds = array<i64: 64, 128>}, {pipeline_mode = #tpu.pipeline_mode<synchronous>, transform_indices = @transform_6, window_bounds = array<i64: 128, 784>}, {transform_indices = @transform_7, window_bounds = array<i64: 16, 784>}, {transform_indices = @transform_8, window_bounds = array<i64: 16, 128>}]} {
    %c0 = arith.constant 0 : index
    %c0_0 = arith.constant 0 : index
    %0 = vector.load %arg1[%c0, %c0_0] : memref<16x784xbf16, #tpu.memory_space<vmem>>, vector<16x784xbf16>
    %c0_1 = arith.constant 0 : index
    %c0_2 = arith.constant 0 : index
    %1 = vector.load %arg2[%c0_1, %c0_2] : memref<784x128xbf16, #tpu.memory_space<vmem>>, vector<784x128xbf16>
    %cst = arith.constant dense<0.000000e+00> : vector<16x128xf32>
    %2 = tpu.matmul %0, %1, %cst {dimension_numbers = #tpu.dot_dimension_numbers<[1], [0], [0], [1], [0, 0, 1, 1], [], []>} : vector<16x784xbf16>, vector<784x128xbf16>, vector<16x128xf32> -> vector<16x128xf32>
    %3 = arith.negf %2 : vector<16x128xf32>
    %4 = math.exp %3 : vector<16x128xf32>
    %cst_3 = arith.constant 1.000000e+00 : f32
    %5 = vector.broadcast %cst_3 : f32 to vector<16x128xf32>
    %6 = arith.addf %5, %4 : vector<16x128xf32>
    %7 = arith.divf %5, %6 : vector<16x128xf32>
    %8 = arith.truncf %7 : vector<16x128xf32> to vector<16x128xbf16>
    %c0_4 = arith.constant 0 : index
    %c0_5 = arith.constant 0 : index
    %9 = vector.load %arg3[%c0_4, %c0_5] : memref<128x64xbf16, #tpu.memory_space<vmem>>, vector<128x64xbf16>
    %cst_6 = arith.constant dense<0.000000e+00> : vector<16x64xf32>
    %10 = tpu.matmul %8, %9, %cst_6 {dimension_numbers = #tpu.dot_dimension_numbers<[1], [0], [0], [1], [0, 0, 1, 1], [], []>} : vector<16x128xbf16>, vector<128x64xbf16>, vector<16x64xf32> -> vector<16x64xf32>
    %11 = arith.negf %10 : vector<16x64xf32>
    %12 = math.exp %11 : vector<16x64xf32>
    %cst_7 = arith.constant 1.000000e+00 : f32
    %13 = vector.broadcast %cst_7 : f32 to vector<16x64xf32>
    %14 = arith.addf %13, %12 : vector<16x64xf32>
    %15 = arith.divf %13, %14 : vector<16x64xf32>
    %16 = arith.truncf %15 : vector<16x64xf32> to vector<16x64xbf16>
    %c0_8 = arith.constant 0 : index
    %c0_9 = arith.constant 0 : index
    %17 = vector.load %arg4[%c0_8, %c0_9] : memref<64x16xbf16, #tpu.memory_space<vmem>>, vector<64x16xbf16>
    %cst_10 = arith.constant dense<0.000000e+00> : vector<16x16xf32>
    %18 = tpu.matmul %16, %17, %cst_10 {dimension_numbers = #tpu.dot_dimension_numbers<[1], [0], [0], [1], [0, 0, 1, 1], [], []>} : vector<16x64xbf16>, vector<64x16xbf16>, vector<16x16xf32> -> vector<16x16xf32>
    %19 = arith.truncf %18 : vector<16x16xf32> to vector<16x16xbf16>
    %c0_11 = arith.constant 0 : index
    %c0_12 = arith.constant 0 : index
    %20 = vector.load %arg5[%c0_11, %c0_12] : memref<16x128xbf16, #tpu.memory_space<vmem>>, vector<16x128xbf16>
    %cst_13 = arith.constant dense<0.000000e+00> : vector<16x128xf32>
    %21 = tpu.matmul %19, %20, %cst_13 {dimension_numbers = #tpu.dot_dimension_numbers<[1], [0], [0], [1], [0, 0, 1, 1], [], []>} : vector<16x16xbf16>, vector<16x128xbf16>, vector<16x128xf32> -> vector<16x128xf32>
    %c0_14 = arith.constant 0 : index
    %c0_15 = arith.constant 0 : index
    %22 = vector.load %arg9[%c0_14, %c0_15] : memref<16x128xf32, #tpu.memory_space<vmem>>, vector<16x128xf32>
    tpu.vector_store %arg9[%c0_14, %c0_15], %21 {strides = array<i32>} : memref<16x128xf32, #tpu.memory_space<vmem>>, vector<16x128xf32>,
    %23 = vector.extract_strided_slice %21 {offsets = [0, 64], sizes = [16, 64], strides = [1, 1]} : vector<16x128xf32> to vector<16x64xf32>
    %24 = math.tanh %23 : vector<16x64xf32>
    %25 = arith.truncf %24 : vector<16x64xf32> to vector<16x64xbf16>
    %c0_16 = arith.constant 0 : index
    %c0_17 = arith.constant 0 : index
    %26 = vector.load %arg6[%c0_16, %c0_17] : memref<64x128xbf16, #tpu.memory_space<vmem>>, vector<64x128xbf16>
    %cst_18 = arith.constant dense<0.000000e+00> : vector<16x128xf32>
    %27 = tpu.matmul %25, %26, %cst_18 {dimension_numbers = #tpu.dot_dimension_numbers<[1], [0], [0], [1], [0, 0, 1, 1], [], []>} : vector<16x64xbf16>, vector<64x128xbf16>, vector<16x128xf32> -> vector<16x128xf32>
    %28 = math.tanh %27 : vector<16x128xf32>
    %29 = arith.truncf %28 : vector<16x128xf32> to vector<16x128xbf16>
    %c0_19 = arith.constant 0 : index
    %c0_20 = arith.constant 0 : index
    %30 = vector.load %arg7[%c0_19, %c0_20] : memref<128x784xbf16, #tpu.memory_space<vmem>>, vector<128x784xbf16>
    %cst_21 = arith.constant dense<0.000000e+00> : vector<16x784xf32>
    %31 = tpu.matmul %29, %30, %cst_21 {dimension_numbers = #tpu.dot_dimension_numbers<[1], [0], [0], [1], [0, 0, 1, 1], [], []>} : vector<16x128xbf16>, vector<128x784xbf16>, vector<16x784xf32> -> vector<16x784xf32>
    %32 = math.tanh %31 : vector<16x784xf32>
    %c0_22 = arith.constant 0 : index
    %c0_23 = arith.constant 0 : index
    %33 = vector.load %arg8[%c0_22, %c0_23] : memref<16x784xf32, #tpu.memory_space<vmem>>, vector<16x784xf32>
    tpu.vector_store %arg8[%c0_22, %c0_23], %32 {strides = array<i32>} : memref<16x784xf32, #tpu.memory_space<vmem>>, vector<16x784xf32>,
    return
  }
  func.func @transform_0(%arg0: i32) -> (i32, i32) {
    %c0_i32 = arith.constant 0 : i32
    %c0_i32_0 = arith.constant 0 : i32
    return %arg0, %c0_i32 : i32, i32
  }
  func.func @transform_1(%arg0: i32) -> (i32, i32) {
    %c0_i32 = arith.constant 0 : i32
    %c0_i32_0 = arith.constant 0 : i32
    %c0_i32_1 = arith.constant 0 : i32
    return %c0_i32, %c0_i32_0 : i32, i32
  }
  func.func @transform_2(%arg0: i32) -> (i32, i32) {
    %c0_i32 = arith.constant 0 : i32
    %c0_i32_0 = arith.constant 0 : i32
    %c0_i32_1 = arith.constant 0 : i32
    return %c0_i32, %c0_i32_0 : i32, i32
  }
  func.func @transform_3(%arg0: i32) -> (i32, i32) {
    %c0_i32 = arith.constant 0 : i32
    %c0_i32_0 = arith.constant 0 : i32
    %c0_i32_1 = arith.constant 0 : i32
    return %c0_i32, %c0_i32_0 : i32, i32
  }
  func.func @transform_4(%arg0: i32) -> (i32, i32) {
    %c0_i32 = arith.constant 0 : i32
    %c0_i32_0 = arith.constant 0 : i32
    %c0_i32_1 = arith.constant 0 : i32
    return %c0_i32, %c0_i32_0 : i32, i32
  }
  func.func @transform_5(%arg0: i32) -> (i32, i32) {
    %c0_i32 = arith.constant 0 : i32
    %c0_i32_0 = arith.constant 0 : i32
    %c0_i32_1 = arith.constant 0 : i32
    return %c0_i32, %c0_i32_0 : i32, i32
  }
  func.func @transform_6(%arg0: i32) -> (i32, i32) {
    %c0_i32 = arith.constant 0 : i32
    %c0_i32_0 = arith.constant 0 : i32
    %c0_i32_1 = arith.constant 0 : i32
    return %c0_i32, %c0_i32_0 : i32, i32
  }
  func.func @transform_7(%arg0: i32) -> (i32, i32) {
    %c0_i32 = arith.constant 0 : i32
    %c0_i32_0 = arith.constant 0 : i32
    return %arg0, %c0_i32 : i32, i32
  }
  func.func @transform_8(%arg0: i32) -> (i32, i32) {
    %c0_i32 = arith.constant 0 : i32
    %c0_i32_0 = arith.constant 0 : i32
    return %arg0, %c0_i32 : i32, i32
  }
}

</mosaic_0001>

<llo_original>
// kernel: tpu_custom_call.1
$region0: #{tpu_custom_call.1}
  #allocation0 [shape = 'u32[]', space=smem, size = 0x4, offset = 0x4, fixed_abs, tag = 'smem constant byte address 0x4 - core index']
  #allocation1 [shape = 'u32[72,128]{1,0:T(1,128)}', space=vmem, size = 0x9000, scoped, tag = 'internal scratch']
  %s0 = inlined_call_operand.vmem [shape: bf16[16,784], index: 0, kind: input, shape index: {}]
  %s1 = inlined_call_operand.vmem [shape: bf16[784,128], index: 1, kind: input, shape index: {}]
  %s2 = inlined_call_operand.vmem [shape: bf16[128,64], index: 2, kind: input, shape index: {}]
  %s3 = inlined_call_operand.vmem [shape: bf16[64,16], index: 3, kind: input, shape index: {}]
  %s4 = inlined_call_operand.vmem [shape: bf16[16,128], index: 4, kind: input, shape index: {}]
  %s5 = inlined_call_operand.vmem [shape: bf16[64,128], index: 5, kind: input, shape index: {}]
  %s6 = inlined_call_operand.vmem [shape: bf16[128,784], index: 6, kind: input, shape index: {}]
  %s7 = inlined_call_operand.hbm [shape: f32[16,784], index: 7, kind: output, shape index: {0}]
  %s8 = inlined_call_operand.hbm [shape: f32[16,128], index: 8, kind: output, shape index: {1}]
  %9 = xla_tuple %s7, %s8
  %s10 = sld [smem:[#allocation0]]
  $region46: #{tpu_custom_call.1} parent=0
    _
  %s12 = ssub.s32 1, %s10
  %s13 = scalar_select 0, %s12, %s10
  $region1: #{tpu_custom_call.1} parent=0
    #allocation2 [shape = 'u8[57344]{0}', space=vmem, size = 0xe000, scoped, tag = 'output window, operand 0, single buffered']
    #allocation3 [shape = 's32[1]{0}', space=sflag, size = 0x4, scoped, tag = 'scoped memory for tpu_custom_call.1']
    #allocation4 [shape = 'u8[8192]{0}', space=vmem, size = 0x2000, scoped, tag = 'output window, operand 1, single buffered']
    #allocation5 [shape = 's32[1]{0}', space=sflag, size = 0x4, scoped, tag = 'scoped memory for tpu_custom_call.1']
    %14 = vsyncpa [#allocation3], 0
    %15 = vsyncpa [#allocation5], 0
    // Predicated region
    $region2: #{tpu_custom_call.1} parent=1 // pred_check
      _
    $region3: #{tpu_custom_call.1} parent=1 // pred_check_branch
      %17 = sbr.rel (0) target = $region5
    $region4: #{tpu_custom_call.1} parent=1 // pred_region
      _
    $region5: #{tpu_custom_call.1} parent=1 // pred_fallthru
      _
    // Predicated region
    $region6: #{tpu_custom_call.1} parent=1 // pred_check
      _
    $region7: #{tpu_custom_call.1} parent=1 // pred_check_branch
      %19 = sbr.rel (0) target = $region9
    $region8: #{tpu_custom_call.1} parent=1 // pred_region
      _
    $region9: #{tpu_custom_call.1} parent=1 // pred_fallthru
      _
    // Predicated region
    $region10: #{tpu_custom_call.1} parent=1 // pred_check
      _
    $region11: #{tpu_custom_call.1} parent=1 // pred_check_branch
      %21 = sbr.rel (0) target = $region13
    $region12: #{tpu_custom_call.1} parent=1 // pred_region
      _
    $region13: #{tpu_custom_call.1} parent=1 // pred_fallthru
      _
    // Predicated region
    $region14: #{tpu_custom_call.1} parent=1 // pred_check
      _
    $region15: #{tpu_custom_call.1} parent=1 // pred_check_branch
      %23 = sbr.rel (0) target = $region17
    $region16: #{tpu_custom_call.1} parent=1 // pred_region
      _
    $region17: #{tpu_custom_call.1} parent=1 // pred_fallthru
      _
    // Predicated region
    $region18: #{tpu_custom_call.1} parent=1 // pred_check
      _
    $region19: #{tpu_custom_call.1} parent=1 // pred_check_branch
      %25 = sbr.rel (0) target = $region21
    $region20: #{tpu_custom_call.1} parent=1 // pred_region
      _
    $region21: #{tpu_custom_call.1} parent=1 // pred_fallthru
      _
    // Predicated region
    $region22: #{tpu_custom_call.1} parent=1 // pred_check
      _
    $region23: #{tpu_custom_call.1} parent=1 // pred_check_branch
      %27 = sbr.rel (0) target = $region25
    $region24: #{tpu_custom_call.1} parent=1 // pred_region
      _
    $region25: #{tpu_custom_call.1} parent=1 // pred_fallthru
      _
    // Predicated region
    $region26: #{tpu_custom_call.1} parent=1 // pred_check
      _
    $region27: #{tpu_custom_call.1} parent=1 // pred_check_branch
      %29 = sbr.rel (0) target = $region29
    $region28: #{tpu_custom_call.1} parent=1 // pred_region
      _
    $region29: #{tpu_custom_call.1} parent=1 // pred_fallthru
      _
    %v31 = vld [vmem:[%s0] sm:$0xff]
    %v32 = vld [vmem:[%s0 + $0x8] sm:$0xff]
    %v33 = vld [vmem:[%s0 + $0x10] sm:$0xff]
    %v34 = vld [vmem:[%s0 + $0x18] sm:$0xf]
    %v35 = vld [vmem:[%s0 + $0x1c] sm:$0xff]
    %v36 = vld [vmem:[%s0 + $0x24] sm:$0xff]
    %v37 = vld [vmem:[%s0 + $0x2c] sm:$0xff]
    %v38 = vld [vmem:[%s0 + $0x34] sm:$0xf]
    %v39 = vld [vmem:[%s1] sm:$0xf]
    %v40 = vld [vmem:[%s1 + $0x4] sm:$0xf]
    %v41 = vld [vmem:[%s1 + $0x8] sm:$0xf]
    %v42 = vld [vmem:[%s1 + $0xc] sm:$0xf]
    %v43 = vld [vmem:[%s1 + $0x10] sm:$0xf]
    %v44 = vld [vmem:[%s1 + $0x14] sm:$0xf]
    %v45 = vld [vmem:[%s1 + $0x18] sm:$0xf]
    %v46 = vld [vmem:[%s1 + $0x1c] sm:$0xf]
    %v47 = vld [vmem:[%s1 + $0x20] sm:$0xf]
    %v48 = vld [vmem:[%s1 + $0x24] sm:$0xf]
    %v49 = vld [vmem:[%s1 + $0x28] sm:$0xf]
    %v50 = vld [vmem:[%s1 + $0x2c] sm:$0xf]
    %v51 = vld [vmem:[%s1 + $0x30] sm:$0xf]
    %v52 = vld [vmem:[%s1 + $0x34] sm:$0xf]
    %v53 = vld [vmem:[%s1 + $0x38] sm:$0xf]
    %v54 = vld [vmem:[%s1 + $0x3c] sm:$0xf]
    %v55 = vld [vmem:[%s1 + $0x40] sm:$0xf]
    %v56 = vld [vmem:[%s1 + $0x44] sm:$0xf]
    %v57 = vld [vmem:[%s1 + $0x48] sm:$0xf]
    %v58 = vld [vmem:[%s1 + $0x4c] sm:$0xf]
    %v59 = vld [vmem:[%s1 + $0x50] sm:$0xf]
    %v60 = vld [vmem:[%s1 + $0x54] sm:$0xf]
    %v61 = vld [vmem:[%s1 + $0x58] sm:$0xf]
    %v62 = vld [vmem:[%s1 + $0x5c] sm:$0xf]
    %v63 = vld [vmem:[%s1 + $0x60] sm:$0xf]
    %v64 = vld [vmem:[%s1 + $0x64] sm:$0xf]
    %v65 = vld [vmem:[%s1 + $0x68] sm:$0xf]
    %v66 = vld [vmem:[%s1 + $0x6c] sm:$0xf]
    %v67 = vld [vmem:[%s1 + $0x70] sm:$0xf]
    %v68 = vld [vmem:[%s1 + $0x74] sm:$0xf]
    %v69 = vld [vmem:[%s1 + $0x78] sm:$0xf]
    %v70 = vld [vmem:[%s1 + $0x7c] sm:$0xf]
    %v71 = vld [vmem:[%s1 + $0x80] sm:$0xf]
    %v72 = vld [vmem:[%s1 + $0x84] sm:$0xf]
    %v73 = vld [vmem:[%s1 + $0x88] sm:$0xf]
    %v74 = vld [vmem:[%s1 + $0x8c] sm:$0xf]
    %v75 = vld [vmem:[%s1 + $0x90] sm:$0xf]
    %v76 = vld [vmem:[%s1 + $0x94] sm:$0xf]
    %v77 = vld [vmem:[%s1 + $0x98] sm:$0xf]
    %v78 = vld [vmem:[%s1 + $0x9c] sm:$0xf]
    %v79 = vld [vmem:[%s1 + $0xa0] sm:$0xf]
    %v80 = vld [vmem:[%s1 + $0xa4] sm:$0xf]
    %v81 = vld [vmem:[%s1 + $0xa8] sm:$0xf]
    %v82 = vld [vmem:[%s1 + $0xac] sm:$0xf]
    %v83 = vld [vmem:[%s1 + $0xb0] sm:$0xf]
    %v84 = vld [vmem:[%s1 + $0xb4] sm:$0xf]
    %v85 = vld [vmem:[%s1 + $0xb8] sm:$0xf]
    %v86 = vld [vmem:[%s1 + $0xbc] sm:$0xf]
    %v87 = vld [vmem:[%s1 + $0xc0] sm:$0xf]
    %v88 = vld [vmem:[%s1 + $0xc4] sm:$0xf]
    %v89 = vld [vmem:[%s1 + $0xc8] sm:$0xf]
    %v90 = vld [vmem:[%s1 + $0xcc] sm:$0xf]
    %v91 = vld [vmem:[%s1 + $0xd0] sm:$0xf]
    %v92 = vld [vmem:[%s1 + $0xd4] sm:$0xf]
    %v93 = vld [vmem:[%s1 + $0xd8] sm:$0xf]
    %v94 = vld [vmem:[%s1 + $0xdc] sm:$0xf]
    %v95 = vld [vmem:[%s1 + $0xe0] sm:$0xf]
    %v96 = vld [vmem:[%s1 + $0xe4] sm:$0xf]
    %v97 = vld [vmem:[%s1 + $0xe8] sm:$0xf]
    %v98 = vld [vmem:[%s1 + $0xec] sm:$0xf]
    %v99 = vld [vmem:[%s1 + $0xf0] sm:$0xf]
    %v100 = vld [vmem:[%s1 + $0xf4] sm:$0xf]
    %v101 = vld [vmem:[%s1 + $0xf8] sm:$0xf]
    %v102 = vld [vmem:[%s1 + $0xfc] sm:$0xf]
    %v103 = vld [vmem:[%s1 + $0x100] sm:$0xf]
    %v104 = vld [vmem:[%s1 + $0x104] sm:$0xf]
    %v105 = vld [vmem:[%s1 + $0x108] sm:$0xf]
    %v106 = vld [vmem:[%s1 + $0x10c] sm:$0xf]
    %v107 = vld [vmem:[%s1 + $0x110] sm:$0xf]
    %v108 = vld [vmem:[%s1 + $0x114] sm:$0xf]
    %v109 = vld [vmem:[%s1 + $0x118] sm:$0xf]
    %v110 = vld [vmem:[%s1 + $0x11c] sm:$0xf]
    %v111 = vld [vmem:[%s1 + $0x120] sm:$0xf]
    %v112 = vld [vmem:[%s1 + $0x124] sm:$0xf]
    %v113 = vld [vmem:[%s1 + $0x128] sm:$0xf]
    %v114 = vld [vmem:[%s1 + $0x12c] sm:$0xf]
    %v115 = vld [vmem:[%s1 + $0x130] sm:$0xf]
    %v116 = vld [vmem:[%s1 + $0x134] sm:$0xf]
    %v117 = vld [vmem:[%s1 + $0x138] sm:$0xf]
    %v118 = vld [vmem:[%s1 + $0x13c] sm:$0xf]
    %v119 = vld [vmem:[%s1 + $0x140] sm:$0xf]
    %v120 = vld [vmem:[%s1 + $0x144] sm:$0xf]
    %v121 = vld [vmem:[%s1 + $0x148] sm:$0xf]
    %v122 = vld [vmem:[%s1 + $0x14c] sm:$0xf]
    %v123 = vld [vmem:[%s1 + $0x150] sm:$0xf]
    %v124 = vld [vmem:[%s1 + $0x154] sm:$0xf]
    %v125 = vld [vmem:[%s1 + $0x158] sm:$0xf]
    %v126 = vld [vmem:[%s1 + $0x15c] sm:$0xf]
    %v127 = vld [vmem:[%s1 + $0x160] sm:$0xf]
    %v128 = vld [vmem:[%s1 + $0x164] sm:$0xf]
    %v129 = vld [vmem:[%s1 + $0x168] sm:$0xf]
    %v130 = vld [vmem:[%s1 + $0x16c] sm:$0xf]
    %v131 = vld [vmem:[%s1 + $0x170] sm:$0xf]
    %v132 = vld [vmem:[%s1 + $0x174] sm:$0xf]
    %v133 = vld [vmem:[%s1 + $0x178] sm:$0xf]
    %v134 = vld [vmem:[%s1 + $0x17c] sm:$0xf]
    %v135 = vld [vmem:[%s1 + $0x180] sm:$0xf]
    %v136 = vld [vmem:[%s1 + $0x184] sm:$0xf]
    %v145 = vunpack.c.l.b16 %v31
    %v146 = vunpack.c.h.b16 %v31
    %v147 = vunpack.c.l.b16 %v32
    %v148 = vunpack.c.h.b16 %v32
    %v149 = vunpack.c.l.b16 %v33
    %v150 = vunpack.c.h.b16 %v33
    %v151 = vunpack.c.l.b16 %v34
    %v152 = vunpack.c.l.b16 %v35
    %v153 = vunpack.c.h.b16 %v35
    %v154 = vunpack.c.l.b16 %v36
    %v155 = vunpack.c.h.b16 %v36
    %v156 = vunpack.c.l.b16 %v37
    %v157 = vunpack.c.h.b16 %v37
    %v158 = vunpack.c.l.b16 %v38
    %v159 = vpack.c.b16 %v152, %v145
    %v160 = vpack.c.b16 %v153, %v146
    %v161 = vpack.c.b16 %v154, %v147
    %v162 = vpack.c.b16 %v155, %v148
    %v163 = vpack.c.b16 %v156, %v149
    %v164 = vpack.c.b16 %v157, %v150
    %v165 = vpack.c.b16 %v158, %v151
    %v270 = vunpack.c.l.b16 %v39
    %v271 = vunpack.c.l.b16 %v40
    %v272 = vunpack.c.l.b16 %v41
    %v273 = vunpack.c.l.b16 %v42
    %v274 = vunpack.c.l.b16 %v43
    %v275 = vunpack.c.l.b16 %v44
    %v276 = vunpack.c.l.b16 %v45
    %v277 = vunpack.c.l.b16 %v46
    %v278 = vunpack.c.l.b16 %v47
    %v279 = vunpack.c.l.b16 %v48
    %v280 = vunpack.c.l.b16 %v49
    %v281 = vunpack.c.l.b16 %v50
    %v282 = vunpack.c.l.b16 %v51
    %v283 = vunpack.c.l.b16 %v52
    %v284 = vunpack.c.l.b16 %v53
    %v285 = vunpack.c.l.b16 %v54
    %v286 = vunpack.c.l.b16 %v55
    %v287 = vunpack.c.l.b16 %v56
    %v288 = vunpack.c.l.b16 %v57
    %v289 = vunpack.c.l.b16 %v58
    %v290 = vunpack.c.l.b16 %v59
    %v291 = vunpack.c.l.b16 %v60
    %v292 = vunpack.c.l.b16 %v61
    %v293 = vunpack.c.l.b16 %v62
    %v294 = vunpack.c.l.b16 %v63
    %v295 = vunpack.c.l.b16 %v64
    %v296 = vunpack.c.l.b16 %v65
    %v297 = vunpack.c.l.b16 %v66
    %v298 = vunpack.c.l.b16 %v67
    %v299 = vunpack.c.l.b16 %v68
    %v300 = vunpack.c.l.b16 %v69
    %v301 = vunpack.c.l.b16 %v70
    %v302 = vunpack.c.l.b16 %v71
    %v303 = vunpack.c.l.b16 %v72
    %v304 = vunpack.c.l.b16 %v73
    %v305 = vunpack.c.l.b16 %v74
    %v306 = vunpack.c.l.b16 %v75
    %v307 = vunpack.c.l.b16 %v76
    %v308 = vunpack.c.l.b16 %v77
    %v309 = vunpack.c.l.b16 %v78
    %v310 = vunpack.c.l.b16 %v79
    %v311 = vunpack.c.l.b16 %v80
    %v312 = vunpack.c.l.b16 %v81
    %v313 = vunpack.c.l.b16 %v82
    %v314 = vunpack.c.l.b16 %v83
    %v315 = vunpack.c.l.b16 %v84
    %v316 = vunpack.c.l.b16 %v85
    %v317 = vunpack.c.l.b16 %v86
    %v318 = vunpack.c.l.b16 %v87
    %v319 = vunpack.c.l.b16 %v88
    %v320 = vunpack.c.l.b16 %v89
    %v321 = vunpack.c.l.b16 %v90
    %v322 = vunpack.c.l.b16 %v91
    %v323 = vunpack.c.l.b16 %v92
    %v324 = vunpack.c.l.b16 %v93
    %v325 = vunpack.c.l.b16 %v94
    %v326 = vunpack.c.l.b16 %v95
    %v327 = vunpack.c.l.b16 %v96
    %v328 = vunpack.c.l.b16 %v97
    %v329 = vunpack.c.l.b16 %v98
    %v330 = vunpack.c.l.b16 %v99
    %v331 = vunpack.c.l.b16 %v100
    %v332 = vunpack.c.l.b16 %v101
    %v333 = vunpack.c.l.b16 %v102
    %v334 = vunpack.c.l.b16 %v103
    %v335 = vunpack.c.l.b16 %v104
    %v336 = vunpack.c.l.b16 %v105
    %v337 = vunpack.c.l.b16 %v106
    %v338 = vunpack.c.l.b16 %v107
    %v339 = vunpack.c.l.b16 %v108
    %v340 = vunpack.c.l.b16 %v109
    %v341 = vunpack.c.l.b16 %v110
    %v342 = vunpack.c.l.b16 %v111
    %v343 = vunpack.c.l.b16 %v112
    %v344 = vunpack.c.l.b16 %v113
    %v345 = vunpack.c.l.b16 %v114
    %v346 = vunpack.c.l.b16 %v115
    %v347 = vunpack.c.l.b16 %v116
    %v348 = vunpack.c.l.b16 %v117
    %v349 = vunpack.c.l.b16 %v118
    %v350 = vunpack.c.l.b16 %v119
    %v351 = vunpack.c.l.b16 %v120
    %v352 = vunpack.c.l.b16 %v121
    %v353 = vunpack.c.l.b16 %v122
    %v354 = vunpack.c.l.b16 %v123
    %v355 = vunpack.c.l.b16 %v124
    %v356 = vunpack.c.l.b16 %v125
    %v357 = vunpack.c.l.b16 %v126
    %v358 = vunpack.c.l.b16 %v127
    %v359 = vunpack.c.l.b16 %v128
    %v360 = vunpack.c.l.b16 %v129
    %v361 = vunpack.c.l.b16 %v130
    %v362 = vunpack.c.l.b16 %v131
    %v363 = vunpack.c.l.b16 %v132
    %v364 = vunpack.c.l.b16 %v133
    %v365 = vunpack.c.l.b16 %v134
    %v366 = vunpack.c.l.b16 %v135
    %v367 = vunpack.c.l.b16 %v136
    %v368 = vpack.c.b16 %v271, %v270
    %v369 = vpack.c.b16 %v273, %v272
    %v370 = vpack.c.b16 %v275, %v274
    %v371 = vpack.c.b16 %v277, %v276
    %v372 = vpack.c.b16 %v279, %v278
    %v373 = vpack.c.b16 %v281, %v280
    %v374 = vpack.c.b16 %v283, %v282
    %v375 = vpack.c.b16 %v285, %v284
    %v376 = vpack.c.b16 %v287, %v286
    %v377 = vpack.c.b16 %v289, %v288
    %v378 = vpack.c.b16 %v291, %v290
    %v379 = vpack.c.b16 %v293, %v292
    %v380 = vpack.c.b16 %v295, %v294
    %v381 = vpack.c.b16 %v297, %v296
    %v382 = vpack.c.b16 %v299, %v298
    %v383 = vpack.c.b16 %v301, %v300
    %v384 = vpack.c.b16 %v303, %v302
    %v385 = vpack.c.b16 %v305, %v304
    %v386 = vpack.c.b16 %v307, %v306
    %v387 = vpack.c.b16 %v309, %v308
    %v388 = vpack.c.b16 %v311, %v310
    %v389 = vpack.c.b16 %v313, %v312
    %v390 = vpack.c.b16 %v315, %v314
    %v391 = vpack.c.b16 %v317, %v316
    %v392 = vpack.c.b16 %v319, %v318
    %v393 = vpack.c.b16 %v321, %v320
    %v394 = vpack.c.b16 %v323, %v322
    %v395 = vpack.c.b16 %v325, %v324
    %v396 = vpack.c.b16 %v327, %v326
    %v397 = vpack.c.b16 %v329, %v328
    %v398 = vpack.c.b16 %v331, %v330
    %v399 = vpack.c.b16 %v333, %v332
    %v400 = vpack.c.b16 %v335, %v334
    %v401 = vpack.c.b16 %v337, %v336
    %v402 = vpack.c.b16 %v339, %v338
    %v403 = vpack.c.b16 %v341, %v340
    %v404 = vpack.c.b16 %v343, %v342
    %v405 = vpack.c.b16 %v345, %v344
    %v406 = vpack.c.b16 %v347, %v346
    %v407 = vpack.c.b16 %v349, %v348
    %v408 = vpack.c.b16 %v351, %v350
    %v409 = vpack.c.b16 %v353, %v352
    %v410 = vpack.c.b16 %v355, %v354
    %v411 = vpack.c.b16 %v357, %v356
    %v412 = vpack.c.b16 %v359, %v358
    %v413 = vpack.c.b16 %v361, %v360
    %v414 = vpack.c.b16 %v363, %v362
    %v415 = vpack.c.b16 %v365, %v364
    %v416 = vpack.c.b16 %v367, %v366
    %vm466 = vcmask 130048
    %v468 = vsel %vm466, %v165, 0
    %470 = vmatpush.bf16.msra.mxu0 %v375
    %471 = vmatpush.bf16.msra.mxu0 %v374
    %472 = vmatpush.bf16.msra.mxu0 %v373
    %473 = vmatpush.bf16.msra.mxu0 %v372
    %474 = vmatpush.bf16.msra.mxu0 %v371
    %475 = vmatpush.bf16.msra.mxu0 %v370
    %476 = vmatpush.bf16.msra.mxu0 %v369
    %477 = vmatpush.bf16.msra.mxu0 %v368
    %478 = vmatmul.bf16.gmra.mxu0 %v159
    %v479 = vpop.f32.mrf.mxu0
    %v480 = vadd.f32 0.0, %v479
    %v481 = vpop.f32.mrf.mxu0
    %v482 = vadd.f32 0.0, %v481
    %483 = vdwg.mxu0
    %484 = vmatpush.bf16.msra.mxu0 %v383
    %485 = vmatpush.bf16.msra.mxu0 %v382
    %486 = vmatpush.bf16.msra.mxu0 %v381
    %487 = vmatpush.bf16.msra.mxu0 %v380
    %488 = vmatpush.bf16.msra.mxu0 %v379
    %489 = vmatpush.bf16.msra.mxu0 %v378
    %490 = vmatpush.bf16.msra.mxu0 %v377
    %491 = vmatpush.bf16.msra.mxu0 %v376
    %492 = vmatmul.bf16.gmra.mxu0 %v160
    %v493 = vpop.f32.mrf.mxu0
    %v494 = vadd.f32 %v480, %v493
    %v495 = vpop.f32.mrf.mxu0
    %v496 = vadd.f32 %v482, %v495
    %497 = vdwg.mxu0
    %498 = vmatpush.bf16.msra.mxu0 %v391
    %499 = vmatpush.bf16.msra.mxu0 %v390
    %500 = vmatpush.bf16.msra.mxu0 %v389
    %501 = vmatpush.bf16.msra.mxu0 %v388
    %502 = vmatpush.bf16.msra.mxu0 %v387
    %503 = vmatpush.bf16.msra.mxu0 %v386
    %504 = vmatpush.bf16.msra.mxu0 %v385
    %505 = vmatpush.bf16.msra.mxu0 %v384
    %506 = vmatmul.bf16.gmra.mxu0 %v161
    %v507 = vpop.f32.mrf.mxu0
    %v508 = vadd.f32 %v494, %v507
    %v509 = vpop.f32.mrf.mxu0
    %v510 = vadd.f32 %v496, %v509
    %511 = vdwg.mxu0
    %512 = vmatpush.bf16.msra.mxu0 %v399
    %513 = vmatpush.bf16.msra.mxu0 %v398
    %514 = vmatpush.bf16.msra.mxu0 %v397
    %515 = vmatpush.bf16.msra.mxu0 %v396
    %516 = vmatpush.bf16.msra.mxu0 %v395
    %517 = vmatpush.bf16.msra.mxu0 %v394
    %518 = vmatpush.bf16.msra.mxu0 %v393
    %519 = vmatpush.bf16.msra.mxu0 %v392
    %520 = vmatmul.bf16.gmra.mxu0 %v162
    %v521 = vpop.f32.mrf.mxu0
    %v522 = vadd.f32 %v508, %v521
    %v523 = vpop.f32.mrf.mxu0
    %v524 = vadd.f32 %v510, %v523
    %525 = vdwg.mxu0
    %526 = vmatpush.bf16.msra.mxu0 %v407
    %527 = vmatpush.bf16.msra.mxu0 %v406
    %528 = vmatpush.bf16.msra.mxu0 %v405
    %529 = vmatpush.bf16.msra.mxu0 %v404
    %530 = vmatpush.bf16.msra.mxu0 %v403
    %531 = vmatpush.bf16.msra.mxu0 %v402
    %532 = vmatpush.bf16.msra.mxu0 %v401
    %533 = vmatpush.bf16.msra.mxu0 %v400
    %534 = vmatmul.bf16.gmra.mxu0 %v163
    %v535 = vpop.f32.mrf.mxu0
    %v536 = vadd.f32 %v522, %v535
    %v537 = vpop.f32.mrf.mxu0
    %v538 = vadd.f32 %v524, %v537
    %539 = vdwg.mxu0
    %540 = vmatpush.bf16.msra.mxu0 %v415
    %541 = vmatpush.bf16.msra.mxu0 %v414
    %542 = vmatpush.bf16.msra.mxu0 %v413
    %543 = vmatpush.bf16.msra.mxu0 %v412
    %544 = vmatpush.bf16.msra.mxu0 %v411
    %545 = vmatpush.bf16.msra.mxu0 %v410
    %546 = vmatpush.bf16.msra.mxu0 %v409
    %547 = vmatpush.bf16.msra.mxu0 %v408
    %548 = vmatmul.bf16.gmra.mxu0 %v164
    %v549 = vpop.f32.mrf.mxu0
    %v550 = vadd.f32 %v536, %v549
    %v551 = vpop.f32.mrf.mxu0
    %v552 = vadd.f32 %v538, %v551
    %553 = vdwg.mxu0
    %554 = vmatpush.bf16.msra.mxu0 0
    %555 = vmatpush.bf16.msra.mxu0 0
    %556 = vmatpush.bf16.msra.mxu0 0
    %557 = vmatpush.bf16.msra.mxu0 0
    %558 = vmatpush.bf16.msra.mxu0 0
    %559 = vmatpush.bf16.msra.mxu0 0
    %560 = vmatpush.bf16.msra.mxu0 0
    %561 = vmatpush.bf16.msra.mxu0 %v416
    %562 = vmatmul.bf16.gmra.mxu0 %v468
    %v563 = vpop.f32.mrf.mxu0
    %v564 = vadd.f32 %v550, %v563
    %v565 = vpop.f32.mrf.mxu0
    %v566 = vadd.f32 %v552, %v565
    %567 = vdwg.mxu0
    %v568 = vxor.u32 %v564, 2147483648
    %v569 = vxor.u32 %v566, 2147483648
    %v570 = vmul.f32 %v568, 1.442695
    %v571 = vpow.pop %v570
    %v572 = vmul.f32 %v569, 1.442695
    %v573 = vpow.pop %v572
    %v574 = vadd.f32 %v571, 1.0
    %v575 = vadd.f32 %v573, 1.0
    %v576 = vrcp.pop %v574
    %v577 = vmul.f32 %v574, %v576
    %v578 = vsub.f32 1.0, %v577
    %v579 = vmul.f32 %v576, %v578
    %v580 = vadd.f32 %v576, %v579
    %vm581 = vweird.f32 %v574
    %vm582 = vweird.f32 %v576
    %vm583 = vmor %vm581, %vm582
    %v584 = vsel %vm583, %v576, %v580
    %v585 = vand.u32 2147483647, %v574
    %vm586 = vcmp.eq.f32.partialorder %v585, 8.507059e+37
    %v587 = vand.u32 %v574, 2147483648
    %v588 = vor.u32 1.1754944e-38, %v587
    %v589 = vsel %vm586, %v588, %v584
    %v590 = vmul.f32 1.0, %v589
    %v591 = vrcp.pop %v575
    %v592 = vmul.f32 %v575, %v591
    %v593 = vsub.f32 1.0, %v592
    %v594 = vmul.f32 %v591, %v593
    %v595 = vadd.f32 %v591, %v594
    %vm596 = vweird.f32 %v575
    %vm597 = vweird.f32 %v591
    %vm598 = vmor %vm596, %vm597
    %v599 = vsel %vm598, %v591, %v595
    %v600 = vand.u32 2147483647, %v575
    %vm601 = vcmp.eq.f32.partialorder %v600, 8.507059e+37
    %v602 = vand.u32 %v575, 2147483648
    %v603 = vor.u32 1.1754944e-38, %v602
    %v604 = vsel %vm601, %v603, %v599
    %v605 = vmul.f32 1.0, %v604
    %v606 = vpack.c.bf16 %v605, %v590
    %v607 = vld [vmem:[%s2] sm:$0xf]
    %v608 = vld [vmem:[%s2 + $0x4] sm:$0xf]
    %v609 = vld [vmem:[%s2 + $0x8] sm:$0xf]
    %v610 = vld [vmem:[%s2 + $0xc] sm:$0xf]
    %v611 = vld [vmem:[%s2 + $0x10] sm:$0xf]
    %v612 = vld [vmem:[%s2 + $0x14] sm:$0xf]
    %v613 = vld [vmem:[%s2 + $0x18] sm:$0xf]
    %v614 = vld [vmem:[%s2 + $0x1c] sm:$0xf]
    %v615 = vld [vmem:[%s2 + $0x20] sm:$0xf]
    %v616 = vld [vmem:[%s2 + $0x24] sm:$0xf]
    %v617 = vld [vmem:[%s2 + $0x28] sm:$0xf]
    %v618 = vld [vmem:[%s2 + $0x2c] sm:$0xf]
    %v619 = vld [vmem:[%s2 + $0x30] sm:$0xf]
    %v620 = vld [vmem:[%s2 + $0x34] sm:$0xf]
    %v621 = vld [vmem:[%s2 + $0x38] sm:$0xf]
    %v622 = vld [vmem:[%s2 + $0x3c] sm:$0xf]
    %v639 = vunpack.c.l.b16 %v607
    %v640 = vunpack.c.l.b16 %v608
    %v641 = vunpack.c.l.b16 %v609
    %v642 = vunpack.c.l.b16 %v610
    %v643 = vunpack.c.l.b16 %v611
    %v644 = vunpack.c.l.b16 %v612
    %v645 = vunpack.c.l.b16 %v613
    %v646 = vunpack.c.l.b16 %v614
    %v647 = vunpack.c.l.b16 %v615
    %v648 = vunpack.c.l.b16 %v616
    %v649 = vunpack.c.l.b16 %v617
    %v650 = vunpack.c.l.b16 %v618
    %v651 = vunpack.c.l.b16 %v619
    %v652 = vunpack.c.l.b16 %v620
    %v653 = vunpack.c.l.b16 %v621
    %v654 = vunpack.c.l.b16 %v622
    %v655 = vpack.c.b16 %v640, %v639
    %v656 = vpack.c.b16 %v642, %v641
    %v657 = vpack.c.b16 %v644, %v643
    %v658 = vpack.c.b16 %v646, %v645
    %v659 = vpack.c.b16 %v648, %v647
    %v660 = vpack.c.b16 %v650, %v649
    %v661 = vpack.c.b16 %v652, %v651
    %v662 = vpack.c.b16 %v654, %v653
    %671 = vmatpush.bf16.msra.mxu0 %v662
    %672 = vmatpush.bf16.msra.mxu0 %v661
    %673 = vmatpush.bf16.msra.mxu0 %v660
    %674 = vmatpush.bf16.msra.mxu0 %v659
    %675 = vmatpush.bf16.msra.mxu0 %v658
    %676 = vmatpush.bf16.msra.mxu0 %v657
    %677 = vmatpush.bf16.msra.mxu0 %v656
    %678 = vmatpush.bf16.msra.mxu0 %v655
    %679 = vmatmul.bf16.gmra.mxu0 %v606
    %v680 = vpop.f32.mrf.mxu0
    %v681 = vadd.f32 0.0, %v680
    %v682 = vpop.f32.mrf.mxu0
    %v683 = vadd.f32 0.0, %v682
    %684 = vdwg.mxu0
    %v685 = vxor.u32 %v681, 2147483648
    %v686 = vxor.u32 %v683, 2147483648
    %v687 = vmul.f32 %v685, 1.442695
    %v688 = vpow.pop %v687
    %v689 = vmul.f32 %v686, 1.442695
    %v690 = vpow.pop %v689
    %v691 = vadd.f32 %v688, 1.0
    %v692 = vadd.f32 %v690, 1.0
    %v693 = vrcp.pop %v691
    %v694 = vmul.f32 %v691, %v693
    %v695 = vsub.f32 1.0, %v694
    %v696 = vmul.f32 %v693, %v695
    %v697 = vadd.f32 %v693, %v696
    %vm698 = vweird.f32 %v691
    %vm699 = vweird.f32 %v693
    %vm700 = vmor %vm698, %vm699
    %v701 = vsel %vm700, %v693, %v697
    %v702 = vand.u32 2147483647, %v691
    %vm703 = vcmp.eq.f32.partialorder %v702, 8.507059e+37
    %v704 = vand.u32 %v691, 2147483648
    %v705 = vor.u32 1.1754944e-38, %v704
    %v706 = vsel %vm703, %v705, %v701
    %v707 = vmul.f32 1.0, %v706
    %v708 = vrcp.pop %v692
    %v709 = vmul.f32 %v692, %v708
    %v710 = vsub.f32 1.0, %v709
    %v711 = vmul.f32 %v708, %v710
    %v712 = vadd.f32 %v708, %v711
    %vm713 = vweird.f32 %v692
    %vm714 = vweird.f32 %v708
    %vm715 = vmor %vm713, %vm714
    %v716 = vsel %vm715, %v708, %v712
    %v717 = vand.u32 2147483647, %v692
    %vm718 = vcmp.eq.f32.partialorder %v717, 8.507059e+37
    %v719 = vand.u32 %v692, 2147483648
    %v720 = vor.u32 1.1754944e-38, %v719
    %v721 = vsel %vm718, %v720, %v716
    %v722 = vmul.f32 1.0, %v721
    %v723 = vpack.c.bf16 %v722, %v707
    %v724 = vld [vmem:[%s3] sm:$0xf]
    %v725 = vld [vmem:[%s3 + $0x4] sm:$0xf]
    %v726 = vld [vmem:[%s3 + $0x8] sm:$0xf]
    %v727 = vld [vmem:[%s3 + $0xc] sm:$0xf]
    %v728 = vld [vmem:[%s3 + $0x10] sm:$0xf]
    %v729 = vld [vmem:[%s3 + $0x14] sm:$0xf]
    %v730 = vld [vmem:[%s3 + $0x18] sm:$0xf]
    %v731 = vld [vmem:[%s3 + $0x1c] sm:$0xf]
    %v740 = vunpack.c.l.b16 %v724
    %v741 = vunpack.c.l.b16 %v725
    %v742 = vunpack.c.l.b16 %v726
    %v743 = vunpack.c.l.b16 %v727
    %v744 = vunpack.c.l.b16 %v728
    %v745 = vunpack.c.l.b16 %v729
    %v746 = vunpack.c.l.b16 %v730
    %v747 = vunpack.c.l.b16 %v731
    %v748 = vpack.c.b16 %v741, %v740
    %v749 = vpack.c.b16 %v743, %v742
    %v750 = vpack.c.b16 %v745, %v744
    %v751 = vpack.c.b16 %v747, %v746
    %vm756 = vcmask 523264
    %v758 = vsel %vm756, %v723, 0
    %760 = vmatpush.bf16.msra.mxu0 0
    %761 = vmatpush.bf16.msra.mxu0 0
    %762 = vmatpush.bf16.msra.mxu0 0
    %763 = vmatpush.bf16.msra.mxu0 0
    %764 = vmatpush.bf16.msra.mxu0 %v751
    %765 = vmatpush.bf16.msra.mxu0 %v750
    %766 = vmatpush.bf16.msra.mxu0 %v749
    %767 = vmatpush.bf16.msra.mxu0 %v748
    %768 = vmatmul.bf16.gmra.mxu0 %v758
    %v769 = vpop.f32.mrf.mxu0
    %v770 = vadd.f32 0.0, %v769
    %v771 = vpop.f32.mrf.mxu0
    %v772 = vadd.f32 0.0, %v771
    %773 = vdwg.mxu0
    %v774 = vpack.c.bf16 %v772, %v770
    %v775 = vld [vmem:[%s4] sm:$0xf]
    %v776 = vld [vmem:[%s4 + $0x4] sm:$0xf]
    %v779 = vunpack.c.l.b16 %v775
    %v780 = vunpack.c.l.b16 %v776
    %v781 = vpack.c.b16 %v780, %v779
    %v784 = vsel %vm466, %v774, 0
    %786 = vmatpush.bf16.msra.mxu0 0
    %787 = vmatpush.bf16.msra.mxu0 0
    %788 = vmatpush.bf16.msra.mxu0 0
    %789 = vmatpush.bf16.msra.mxu0 0
    %790 = vmatpush.bf16.msra.mxu0 0
    %791 = vmatpush.bf16.msra.mxu0 0
    %792 = vmatpush.bf16.msra.mxu0 0
    %793 = vmatpush.bf16.msra.mxu0 %v781
    %794 = vmatmul.bf16.gmra.mxu0 %v784
    %v795 = vpop.f32.mrf.mxu0
    %v796 = vadd.f32 0.0, %v795
    %v797 = vpop.f32.mrf.mxu0
    %v798 = vadd.f32 0.0, %v797
    %799 = vdwg.mxu0
    %800 = vst [vmem:[#allocation4] sm:$0xff] %v796
    %801 = vst [vmem:[#allocation4 + $0x8] sm:$0xff] %v798
    %v802 = vtanh.pop %v796
    %v803 = vtanh.pop %v798
    %v804 = vpack.c.bf16 %v803, %v802
    %v805 = vld [vmem:[%s5] sm:$0xf]
    %v806 = vld [vmem:[%s5 + $0x4] sm:$0xf]
    %v807 = vld [vmem:[%s5 + $0x8] sm:$0xf]
    %v808 = vld [vmem:[%s5 + $0xc] sm:$0xf]
    %v809 = vld [vmem:[%s5 + $0x10] sm:$0xf]
    %v810 = vld [vmem:[%s5 + $0x14] sm:$0xf]
    %v811 = vld [vmem:[%s5 + $0x18] sm:$0xf]
    %v812 = vld [vmem:[%s5 + $0x1c] sm:$0xf]
    %814 = vrot.lane.b32.xlu0 %v804, 64
    %v815 = vpop.permute.xlu0 %814
    %v824 = vunpack.c.l.b16 %v805
    %v825 = vunpack.c.l.b16 %v806
    %v826 = vunpack.c.l.b16 %v807
    %v827 = vunpack.c.l.b16 %v808
    %v828 = vunpack.c.l.b16 %v809
    %v829 = vunpack.c.l.b16 %v810
    %v830 = vunpack.c.l.b16 %v811
    %v831 = vunpack.c.l.b16 %v812
    %v832 = vpack.c.b16 %v825, %v824
    %v833 = vpack.c.b16 %v827, %v826
    %v834 = vpack.c.b16 %v829, %v828
    %v835 = vpack.c.b16 %v831, %v830
    %v841 = vsel %vm756, %v815, 0
    %843 = vmatpush.bf16.msra.mxu0 0
    %844 = vmatpush.bf16.msra.mxu0 0
    %845 = vmatpush.bf16.msra.mxu0 0
    %846 = vmatpush.bf16.msra.mxu0 0
    %847 = vmatpush.bf16.msra.mxu0 %v835
    %848 = vmatpush.bf16.msra.mxu0 %v834
    %849 = vmatpush.bf16.msra.mxu0 %v833
    %850 = vmatpush.bf16.msra.mxu0 %v832
    %851 = vmatmul.bf16.gmra.mxu0 %v841
    %v852 = vpop.f32.mrf.mxu0
    %v853 = vadd.f32 0.0, %v852
    %v854 = vpop.f32.mrf.mxu0
    %v855 = vadd.f32 0.0, %v854
    %856 = vdwg.mxu0
    %v857 = vtanh.pop %v853
    %v858 = vtanh.pop %v855
    %v859 = vpack.c.bf16 %v858, %v857
    %v860 = vld [vmem:[%s6] sm:$0xff]
    %v861 = vld [vmem:[%s6 + $0x8] sm:$0xff]
    %v862 = vld [vmem:[%s6 + $0x10] sm:$0xff]
    %v863 = vld [vmem:[%s6 + $0x18] sm:$0xf]
    %v864 = vld [vmem:[%s6 + $0x1c] sm:$0xff]
    %v865 = vld [vmem:[%s6 + $0x24] sm:$0xff]
    %v866 = vld [vmem:[%s6 + $0x2c] sm:$0xff]
    %v867 = vld [vmem:[%s6 + $0x34] sm:$0xf]
    %v868 = vld [vmem:[%s6 + $0x38] sm:$0xff]
    %v869 = vld [vmem:[%s6 + $0x40] sm:$0xff]
    %v870 = vld [vmem:[%s6 + $0x48] sm:$0xff]
    %v871 = vld [vmem:[%s6 + $0x50] sm:$0xf]
    %v872 = vld [vmem:[%s6 + $0x54] sm:$0xff]
    %v873 = vld [vmem:[%s6 + $0x5c] sm:$0xff]
    %v874 = vld [vmem:[%s6 + $0x64] sm:$0xff]
    %v875 = vld [vmem:[%s6 + $0x6c] sm:$0xf]
    %v876 = vld [vmem:[%s6 + $0x70] sm:$0xff]
    %v877 = vld [vmem:[%s6 + $0x78] sm:$0xff]
    %v878 = vld [vmem:[%s6 + $0x80] sm:$0xff]
    %v879 = vld [vmem:[%s6 + $0x88] sm:$0xf]
    %v880 = vld [vmem:[%s6 + $0x8c] sm:$0xff]
    %v881 = vld [vmem:[%s6 + $0x94] sm:$0xff]
    %v882 = vld [vmem:[%s6 + $0x9c] sm:$0xff]
    %v883 = vld [vmem:[%s6 + $0xa4] sm:$0xf]
    %v884 = vld [vmem:[%s6 + $0xa8] sm:$0xff]
    %v885 = vld [vmem:[%s6 + $0xb0] sm:$0xff]
    %v886 = vld [vmem:[%s6 + $0xb8] sm:$0xff]
    %v887 = vld [vmem:[%s6 + $0xc0] sm:$0xf]
    %v888 = vld [vmem:[%s6 + $0xc4] sm:$0xff]
    %v889 = vld [vmem:[%s6 + $0xcc] sm:$0xff]
    %v890 = vld [vmem:[%s6 + $0xd4] sm:$0xff]
    %v891 = vld [vmem:[%s6 + $0xdc] sm:$0xf]
    %v892 = vld [vmem:[%s6 + $0xe0] sm:$0xff]
    %v893 = vld [vmem:[%s6 + $0xe8] sm:$0xff]
    %v894 = vld [vmem:[%s6 + $0xf0] sm:$0xff]
    %v895 = vld [vmem:[%s6 + $0xf8] sm:$0xf]
    %v896 = vld [vmem:[%s6 + $0xfc] sm:$0xff]
    %v897 = vld [vmem:[%s6 + $0x104] sm:$0xff]
    %v898 = vld [vmem:[%s6 + $0x10c] sm:$0xff]
    %v899 = vld [vmem:[%s6 + $0x114] sm:$0xf]
    %v900 = vld [vmem:[%s6 + $0x118] sm:$0xff]
    %v901 = vld [vmem:[%s6 + $0x120] sm:$0xff]
    %v902 = vld [vmem:[%s6 + $0x128] sm:$0xff]
    %v903 = vld [vmem:[%s6 + $0x130] sm:$0xf]
    %v904 = vld [vmem:[%s6 + $0x134] sm:$0xff]
    %v905 = vld [vmem:[%s6 + $0x13c] sm:$0xff]
    %v906 = vld [vmem:[%s6 + $0x144] sm:$0xff]
    %v907 = vld [vmem:[%s6 + $0x14c] sm:$0xf]
    %v908 = vld [vmem:[%s6 + $0x150] sm:$0xff]
    %v909 = vld [vmem:[%s6 + $0x158] sm:$0xff]
    %v910 = vld [vmem:[%s6 + $0x160] sm:$0xff]
    %v911 = vld [vmem:[%s6 + $0x168] sm:$0xf]
    %v912 = vld [vmem:[%s6 + $0x16c] sm:$0xff]
    %v913 = vld [vmem:[%s6 + $0x174] sm:$0xff]
    %v914 = vld [vmem:[%s6 + $0x17c] sm:$0xff]
    %v915 = vld [vmem:[%s6 + $0x184] sm:$0xf]
    %v916 = vld [vmem:[%s6 + $0x188] sm:$0xff]
    %v917 = vld [vmem:[%s6 + $0x190] sm:$0xff]
    %v918 = vld [vmem:[%s6 + $0x198] sm:$0xff]
    %v919 = vld [vmem:[%s6 + $0x1a0] sm:$0xf]
    %v920 = vld [vmem:[%s6 + $0x1a4] sm:$0xff]
    %v921 = vld [vmem:[%s6 + $0x1ac] sm:$0xff]
    %v922 = vld [vmem:[%s6 + $0x1b4] sm:$0xff]
    %v923 = vld [vmem:[%s6 + $0x1bc] sm:$0xf]
    %v988 = vunpack.c.l.b16 %v860
    %v989 = vunpack.c.h.b16 %v860
    %v990 = vunpack.c.l.b16 %v861
    %v991 = vunpack.c.h.b16 %v861
    %v992 = vunpack.c.l.b16 %v862
    %v993 = vunpack.c.h.b16 %v862
    %v994 = vunpack.c.l.b16 %v863
    %v995 = vunpack.c.l.b16 %v864
    %v996 = vunpack.c.h.b16 %v864
    %v997 = vunpack.c.l.b16 %v865
    %v998 = vunpack.c.h.b16 %v865
    %v999 = vunpack.c.l.b16 %v866
    %v1000 = vunpack.c.h.b16 %v866
    %v1001 = vunpack.c.l.b16 %v867
    %v1002 = vunpack.c.l.b16 %v868
    %v1003 = vunpack.c.h.b16 %v868
    %v1004 = vunpack.c.l.b16 %v869
    %v1005 = vunpack.c.h.b16 %v869
    %v1006 = vunpack.c.l.b16 %v870
    %v1007 = vunpack.c.h.b16 %v870
    %v1008 = vunpack.c.l.b16 %v871
    %v1009 = vunpack.c.l.b16 %v872
    %v1010 = vunpack.c.h.b16 %v872
    %v1011 = vunpack.c.l.b16 %v873
    %v1012 = vunpack.c.h.b16 %v873
    %v1013 = vunpack.c.l.b16 %v874
    %v1014 = vunpack.c.h.b16 %v874
    %v1015 = vunpack.c.l.b16 %v875
    %v1016 = vunpack.c.l.b16 %v876
    %v1017 = vunpack.c.h.b16 %v876
    %v1018 = vunpack.c.l.b16 %v877
    %v1019 = vunpack.c.h.b16 %v877
    %v1020 = vunpack.c.l.b16 %v878
    %v1021 = vunpack.c.h.b16 %v878
    %v1022 = vunpack.c.l.b16 %v879
    %v1023 = vunpack.c.l.b16 %v880
    %v1024 = vunpack.c.h.b16 %v880
    %v1025 = vunpack.c.l.b16 %v881
    %v1026 = vunpack.c.h.b16 %v881
    %v1027 = vunpack.c.l.b16 %v882
    %v1028 = vunpack.c.h.b16 %v882
    %v1029 = vunpack.c.l.b16 %v883
    %v1030 = vunpack.c.l.b16 %v884
    %v1031 = vunpack.c.h.b16 %v884
    %v1032 = vunpack.c.l.b16 %v885
    %v1033 = vunpack.c.h.b16 %v885
    %v1034 = vunpack.c.l.b16 %v886
    %v1035 = vunpack.c.h.b16 %v886
    %v1036 = vunpack.c.l.b16 %v887
    %v1037 = vunpack.c.l.b16 %v888
    %v1038 = vunpack.c.h.b16 %v888
    %v1039 = vunpack.c.l.b16 %v889
    %v1040 = vunpack.c.h.b16 %v889
    %v1041 = vunpack.c.l.b16 %v890
    %v1042 = vunpack.c.h.b16 %v890
    %v1043 = vunpack.c.l.b16 %v891
    %v1044 = vunpack.c.l.b16 %v892
    %v1045 = vunpack.c.h.b16 %v892
    %v1046 = vunpack.c.l.b16 %v893
    %v1047 = vunpack.c.h.b16 %v893
    %v1048 = vunpack.c.l.b16 %v894
    %v1049 = vunpack.c.h.b16 %v894
    %v1050 = vunpack.c.l.b16 %v895
    %v1051 = vunpack.c.l.b16 %v896
    %v1052 = vunpack.c.h.b16 %v896
    %v1053 = vunpack.c.l.b16 %v897
    %v1054 = vunpack.c.h.b16 %v897
    %v1055 = vunpack.c.l.b16 %v898
    %v1056 = vunpack.c.h.b16 %v898
    %v1057 = vunpack.c.l.b16 %v899
    %v1058 = vunpack.c.l.b16 %v900
    %v1059 = vunpack.c.h.b16 %v900
    %v1060 = vunpack.c.l.b16 %v901
    %v1061 = vunpack.c.h.b16 %v901
    %v1062 = vunpack.c.l.b16 %v902
    %v1063 = vunpack.c.h.b16 %v902
    %v1064 = vunpack.c.l.b16 %v903
    %v1065 = vunpack.c.l.b16 %v904
    %v1066 = vunpack.c.h.b16 %v904
    %v1067 = vunpack.c.l.b16 %v905
    %v1068 = vunpack.c.h.b16 %v905
    %v1069 = vunpack.c.l.b16 %v906
    %v1070 = vunpack.c.h.b16 %v906
    %v1071 = vunpack.c.l.b16 %v907
    %v1072 = vunpack.c.l.b16 %v908
    %v1073 = vunpack.c.h.b16 %v908
    %v1074 = vunpack.c.l.b16 %v909
    %v1075 = vunpack.c.h.b16 %v909
    %v1076 = vunpack.c.l.b16 %v910
    %v1077 = vunpack.c.h.b16 %v910
    %v1078 = vunpack.c.l.b16 %v911
    %v1079 = vunpack.c.l.b16 %v912
    %v1080 = vunpack.c.h.b16 %v912
    %v1081 = vunpack.c.l.b16 %v913
    %v1082 = vunpack.c.h.b16 %v913
    %v1083 = vunpack.c.l.b16 %v914
    %v1084 = vunpack.c.h.b16 %v914
    %v1085 = vunpack.c.l.b16 %v915
    %v1086 = vunpack.c.l.b16 %v916
    %v1087 = vunpack.c.h.b16 %v916
    %v1088 = vunpack.c.l.b16 %v917
    %v1089 = vunpack.c.h.b16 %v917
    %v1090 = vunpack.c.l.b16 %v918
    %v1091 = vunpack.c.h.b16 %v918
    %v1092 = vunpack.c.l.b16 %v919
    %v1093 = vunpack.c.l.b16 %v920
    %v1094 = vunpack.c.h.b16 %v920
    %v1095 = vunpack.c.l.b16 %v921
    %v1096 = vunpack.c.h.b16 %v921
    %v1097 = vunpack.c.l.b16 %v922
    %v1098 = vunpack.c.h.b16 %v922
    %v1099 = vunpack.c.l.b16 %v923
    %v1100 = vpack.c.b16 %v995, %v988
    %v1101 = vpack.c.b16 %v996, %v989
    %v1102 = vpack.c.b16 %v997, %v990
    %v1103 = vpack.c.b16 %v998, %v991
    %v1104 = vpack.c.b16 %v999, %v992
    %v1105 = vpack.c.b16 %v1000, %v993
    %v1106 = vpack.c.b16 %v1001, %v994
    %v1107 = vpack.c.b16 %v1009, %v1002
    %v1108 = vpack.c.b16 %v1010, %v1003
    %v1109 = vpack.c.b16 %v1011, %v1004
    %v1110 = vpack.c.b16 %v1012, %v1005
    %v1111 = vpack.c.b16 %v1013, %v1006
    %v1112 = vpack.c.b16 %v1014, %v1007
    %v1113 = vpack.c.b16 %v1015, %v1008
    %v1114 = vpack.c.b16 %v1023, %v1016
    %v1115 = vpack.c.b16 %v1024, %v1017
    %v1116 = vpack.c.b16 %v1025, %v1018
    %v1117 = vpack.c.b16 %v1026, %v1019
    %v1118 = vpack.c.b16 %v1027, %v1020
    %v1119 = vpack.c.b16 %v1028, %v1021
    %v1120 = vpack.c.b16 %v1029, %v1022
    %v1121 = vpack.c.b16 %v1037, %v1030
    %v1122 = vpack.c.b16 %v1038, %v1031
    %v1123 = vpack.c.b16 %v1039, %v1032
    %v1124 = vpack.c.b16 %v1040, %v1033
    %v1125 = vpack.c.b16 %v1041, %v1034
    %v1126 = vpack.c.b16 %v1042, %v1035
    %v1127 = vpack.c.b16 %v1043, %v1036
    %v1128 = vpack.c.b16 %v1051, %v1044
    %v1129 = vpack.c.b16 %v1052, %v1045
    %v1130 = vpack.c.b16 %v1053, %v1046
    %v1131 = vpack.c.b16 %v1054, %v1047
    %v1132 = vpack.c.b16 %v1055, %v1048
    %v1133 = vpack.c.b16 %v1056, %v1049
    %v1134 = vpack.c.b16 %v1057, %v1050
    %v1135 = vpack.c.b16 %v1065, %v1058
    %v1136 = vpack.c.b16 %v1066, %v1059
    %v1137 = vpack.c.b16 %v1067, %v1060
    %v1138 = vpack.c.b16 %v1068, %v1061
    %v1139 = vpack.c.b16 %v1069, %v1062
    %v1140 = vpack.c.b16 %v1070, %v1063
    %v1141 = vpack.c.b16 %v1071, %v1064
    %v1142 = vpack.c.b16 %v1079, %v1072
    %v1143 = vpack.c.b16 %v1080, %v1073
    %v1144 = vpack.c.b16 %v1081, %v1074
    %v1145 = vpack.c.b16 %v1082, %v1075
    %v1146 = vpack.c.b16 %v1083, %v1076
    %v1147 = vpack.c.b16 %v1084, %v1077
    %v1148 = vpack.c.b16 %v1085, %v1078
    %v1149 = vpack.c.b16 %v1093, %v1086
    %v1150 = vpack.c.b16 %v1094, %v1087
    %v1151 = vpack.c.b16 %v1095, %v1088
    %v1152 = vpack.c.b16 %v1096, %v1089
    %v1153 = vpack.c.b16 %v1097, %v1090
    %v1154 = vpack.c.b16 %v1098, %v1091
    %v1155 = vpack.c.b16 %v1099, %v1092
    %1212 = vmatpush.bf16.msra.mxu0 %v1149
    %1213 = vmatpush.bf16.msra.mxu0 %v1142
    %1214 = vmatpush.bf16.msra.mxu0 %v1135
    %1215 = vmatpush.bf16.msra.mxu0 %v1128
    %1216 = vmatpush.bf16.msra.mxu0 %v1121
    %1217 = vmatpush.bf16.msra.mxu0 %v1114
    %1218 = vmatpush.bf16.msra.mxu0 %v1107
    %1219 = vmatpush.bf16.msra.mxu0 %v1100
    %1220 = vmatmul.bf16.gmra.mxu0 %v859
    %v1221 = vpop.f32.mrf.mxu0
    %v1222 = vadd.f32 0.0, %v1221
    %v1223 = vpop.f32.mrf.mxu0
    %v1224 = vadd.f32 0.0, %v1223
    %1225 = vdwg.mxu0
    %1226 = vmatpush.bf16.msra.mxu0 %v1150
    %1227 = vmatpush.bf16.msra.mxu0 %v1143
    %1228 = vmatpush.bf16.msra.mxu0 %v1136
    %1229 = vmatpush.bf16.msra.mxu0 %v1129
    %1230 = vmatpush.bf16.msra.mxu0 %v1122
    %1231 = vmatpush.bf16.msra.mxu0 %v1115
    %1232 = vmatpush.bf16.msra.mxu0 %v1108
    %1233 = vmatpush.bf16.msra.mxu0 %v1101
    %1234 = vmatmul.bf16.gmra.mxu0 %v859
    %v1235 = vpop.f32.mrf.mxu0
    %v1236 = vadd.f32 0.0, %v1235
    %v1237 = vpop.f32.mrf.mxu0
    %v1238 = vadd.f32 0.0, %v1237
    %1239 = vdwg.mxu0
    %1240 = vmatpush.bf16.msra.mxu0 %v1151
    %1241 = vmatpush.bf16.msra.mxu0 %v1144
    %1242 = vmatpush.bf16.msra.mxu0 %v1137
    %1243 = vmatpush.bf16.msra.mxu0 %v1130
    %1244 = vmatpush.bf16.msra.mxu0 %v1123
    %1245 = vmatpush.bf16.msra.mxu0 %v1116
    %1246 = vmatpush.bf16.msra.mxu0 %v1109
    %1247 = vmatpush.bf16.msra.mxu0 %v1102
    %1248 = vmatmul.bf16.gmra.mxu0 %v859
    %v1249 = vpop.f32.mrf.mxu0
    %v1250 = vadd.f32 0.0, %v1249
    %v1251 = vpop.f32.mrf.mxu0
    %v1252 = vadd.f32 0.0, %v1251
    %1253 = vdwg.mxu0
    %1254 = vmatpush.bf16.msra.mxu0 %v1152
    %1255 = vmatpush.bf16.msra.mxu0 %v1145
    %1256 = vmatpush.bf16.msra.mxu0 %v1138
    %1257 = vmatpush.bf16.msra.mxu0 %v1131
    %1258 = vmatpush.bf16.msra.mxu0 %v1124
    %1259 = vmatpush.bf16.msra.mxu0 %v1117
    %1260 = vmatpush.bf16.msra.mxu0 %v1110
    %1261 = vmatpush.bf16.msra.mxu0 %v1103
    %1262 = vmatmul.bf16.gmra.mxu0 %v859
    %v1263 = vpop.f32.mrf.mxu0
    %v1264 = vadd.f32 0.0, %v1263
    %v1265 = vpop.f32.mrf.mxu0
    %v1266 = vadd.f32 0.0, %v1265
    %1267 = vdwg.mxu0
    %1268 = vmatpush.bf16.msra.mxu0 %v1153
    %1269 = vmatpush.bf16.msra.mxu0 %v1146
    %1270 = vmatpush.bf16.msra.mxu0 %v1139
    %1271 = vmatpush.bf16.msra.mxu0 %v1132
    %1272 = vmatpush.bf16.msra.mxu0 %v1125
    %1273 = vmatpush.bf16.msra.mxu0 %v1118
    %1274 = vmatpush.bf16.msra.mxu0 %v1111
    %1275 = vmatpush.bf16.msra.mxu0 %v1104
    %1276 = vmatmul.bf16.gmra.mxu0 %v859
    %v1277 = vpop.f32.mrf.mxu0
    %v1278 = vadd.f32 0.0, %v1277
    %v1279 = vpop.f32.mrf.mxu0
    %v1280 = vadd.f32 0.0, %v1279
    %1281 = vdwg.mxu0
    %1282 = vmatpush.bf16.msra.mxu0 %v1154
    %1283 = vmatpush.bf16.msra.mxu0 %v1147
    %1284 = vmatpush.bf16.msra.mxu0 %v1140
    %1285 = vmatpush.bf16.msra.mxu0 %v1133
    %1286 = vmatpush.bf16.msra.mxu0 %v1126
    %1287 = vmatpush.bf16.msra.mxu0 %v1119
    %1288 = vmatpush.bf16.msra.mxu0 %v1112
    %1289 = vmatpush.bf16.msra.mxu0 %v1105
    %1290 = vmatmul.bf16.gmra.mxu0 %v859
    %v1291 = vpop.f32.mrf.mxu0
    %v1292 = vadd.f32 0.0, %v1291
    %v1293 = vpop.f32.mrf.mxu0
    %v1294 = vadd.f32 0.0, %v1293
    %1295 = vdwg.mxu0
    %1296 = vmatpush.bf16.msra.mxu0 %v1155
    %1297 = vmatpush.bf16.msra.mxu0 %v1148
    %1298 = vmatpush.bf16.msra.mxu0 %v1141
    %1299 = vmatpush.bf16.msra.mxu0 %v1134
    %1300 = vmatpush.bf16.msra.mxu0 %v1127
    %1301 = vmatpush.bf16.msra.mxu0 %v1120
    %1302 = vmatpush.bf16.msra.mxu0 %v1113
    %1303 = vmatpush.bf16.msra.mxu0 %v1106
    %1304 = vmatmul.bf16.gmra.mxu0 %v859
    %v1305 = vpop.f32.mrf.mxu0
    %v1306 = vadd.f32 0.0, %v1305
    %v1307 = vpop.f32.mrf.mxu0
    %v1308 = vadd.f32 0.0, %v1307
    %1309 = vdwg.mxu0
    %v1310 = vtanh.pop %v1222
    %v1311 = vtanh.pop %v1236
    %v1312 = vtanh.pop %v1250
    %v1313 = vtanh.pop %v1264
    %v1314 = vtanh.pop %v1278
    %v1315 = vtanh.pop %v1292
    %v1316 = vtanh.pop %v1306
    %v1317 = vtanh.pop %v1224
    %v1318 = vtanh.pop %v1238
    %v1319 = vtanh.pop %v1252
    %v1320 = vtanh.pop %v1266
    %v1321 = vtanh.pop %v1280
    %v1322 = vtanh.pop %v1294
    %v1323 = vtanh.pop %v1308
    %1324 = vst [vmem:[#allocation2] sm:$0xff] %v1310
    %1325 = vst [vmem:[#allocation2 + $0x8] sm:$0xff] %v1311
    %1326 = vst [vmem:[#allocation2 + $0x10] sm:$0xff] %v1312
    %1327 = vst [vmem:[#allocation2 + $0x18] sm:$0xff] %v1313
    %1328 = vst [vmem:[#allocation2 + $0x20] sm:$0xff] %v1314
    %1329 = vst [vmem:[#allocation2 + $0x28] sm:$0xff] %v1315
    %1330 = vst.msk [vmem:[#allocation2 + $0x30] sm:$0xff] %vm466, %v1316
    %1331 = vst [vmem:[#allocation2 + $0x38] sm:$0xff] %v1317
    %1332 = vst [vmem:[#allocation2 + $0x40] sm:$0xff] %v1318
    %1333 = vst [vmem:[#allocation2 + $0x48] sm:$0xff] %v1319
    %1334 = vst [vmem:[#allocation2 + $0x50] sm:$0xff] %v1320
    %1335 = vst [vmem:[#allocation2 + $0x58] sm:$0xff] %v1321
    %1336 = vst [vmem:[#allocation2 + $0x60] sm:$0xff] %v1322
    %1337 = vst.msk [vmem:[#allocation2 + $0x68] sm:$0xff] %vm466, %v1323
    // Predicated region
    $region30: #{tpu_custom_call.1} parent=1 // pred_check
      _
    $region31: #{tpu_custom_call.1} parent=1 // pred_check_branch
      %1339 = sbr.rel (0) target = $region33
    $region32: #{tpu_custom_call.1} parent=1 // pred_region
      %1341 = vsyncadd [#allocation3], 0
      %s1342 = sshll.u32 [#allocation2], 4
      %s1343 = int_to_ptr.vmem [resolvable:$true] %s1342
      %s1344 = sshll.u32 %s7, 4
      %s1345 = int_to_ptr.hbm [resolvable:$true] %s1344
      %1350 = dma.vmem_to_hbm [thread:$0]  %s1343, 1792, %s1345, [#allocation3], 896, 896, 56
    $region33: #{tpu_custom_call.1} parent=1 // pred_fallthru
      _
    // Predicated region
    $region34: #{tpu_custom_call.1} parent=1 // pred_check
      _
    $region35: #{tpu_custom_call.1} parent=1 // pred_check_branch
      %1352 = sbr.rel (0) target = $region37
    $region36: #{tpu_custom_call.1} parent=1 // pred_region
      %1354 = vsyncadd [#allocation5], 0
      %s1355 = sshll.u32 [#allocation4], 4
      %s1356 = int_to_ptr.vmem [resolvable:$true] %s1355
      %s1357 = sshll.u32 %s8, 4
      %s1358 = int_to_ptr.hbm [resolvable:$true] %s1357
      %1363 = dma.vmem_to_hbm [thread:$0]  %s1356, 256, %s1358, [#allocation5], 128, 128, 8
    $region37: #{tpu_custom_call.1} parent=1 // pred_fallthru
      _
    // Predicated region
    $region38: #{tpu_custom_call.1} parent=1 // pred_check
      _
    $region39: #{tpu_custom_call.1} parent=1 // pred_check_branch
      %1365 = sbr.rel (0) target = $region41
    $region40: #{tpu_custom_call.1} parent=1 // pred_region
      %1367 = dma.done [#allocation3], 1792
    $region41: #{tpu_custom_call.1} parent=1 // pred_fallthru
      _
    // Predicated region
    $region42: #{tpu_custom_call.1} parent=1 // pred_check
      _
    $region43: #{tpu_custom_call.1} parent=1 // pred_check_branch
      %1369 = sbr.rel (0) target = $region45
    $region44: #{tpu_custom_call.1} parent=1 // pred_region
      %1371 = dma.done [#allocation5], 256
    $region45: #{tpu_custom_call.1} parent=1 // pred_fallthru
      _
    %1372 = vsyncpa [#allocation3], 1
    %1373 = vsyncpa [#allocation5], 1

</llo_original>
